<compile_context>
chip_gen: v5e
topology: v5e:2x2
jax: 0.10.0
libtpu: 0.0.40
codegen_flags: <defaults>
</compile_context>

<pallas_src>
import functools

import numpy as np
import jax
import jax.numpy as jnp
from jax import lax
from jax.experimental import pallas as pl
from jax.experimental.pallas import tpu as pltpu


def _repconv_kernel(x_ref, w_ref, b_ref, m_ref, o_ref, *, nb, shifts, use_act):
    """One block of NB images per grid step.

    x_ref : (NB, C1, H*W)   flattened NCHW input block
    w_ref : (C2, K)         fused conv weight, K = KS*KS*C1, tap-major order
    b_ref : (C2, 1)         fused conv bias (f32)
    m_ref : (KS*KS, H*W)    per-tap validity masks (1.0 = in-image, 0.0 = pad)
    o_ref : (NB, C2, H*W)   stride-1 conv output, flat spatial (lane dense)
    """
    ntaps = len(shifts)
    wmat = w_ref[...]
    bvec = b_ref[...]
    mvals = m_ref[...]
    # Hoisted per-tap boolean masks (shared across the NB images of this step).
    tap_valid = [mvals[t:t + 1, :] != 0 for t in range(ntaps)]

    for b in range(nb):
        xb = x_ref[b]                                    # (C1, HW)
        taps = []
        for t in range(ntaps):
            # Circular lane roll puts x_flat[j + delta_t] at lane j; lanes whose
            # read would fall outside the image (incl. wrap-around) are zeroed
            # by the tap mask, which reproduces zero padding exactly.
            rolled = xb if shifts[t] == 0 else pltpu.roll(xb, shifts[t], axis=1)
            taps.append(jnp.where(tap_valid[t], rolled, 0.0))
        # Register-resident im2col block (K, HW): single fused MXU contraction.
        p = jnp.concatenate(taps, axis=0) if ntaps > 1 else taps[0]
        acc = jnp.dot(wmat, p, preferred_element_type=jnp.float32,
                      precision=jax.lax.Precision.HIGHEST)
        acc = acc + bvec                                  # bias (C2,1) broadcast
        if use_act:
            acc = jnp.maximum(acc, 0.0)                   # nn.ReLU()
        o_ref[b] = acc.astype(o_ref.dtype)                # one lane-dense store


def repconv_forward(x_nchw, weight, bias, *, stride=1, padding=0, dilation=1,
                    groups=1, use_act=True):
    """x_nchw: (N, C1, H, W); weight: (C2, C1, KH, KW) [PyTorch OIHW]; bias: (C2,)."""
    n, c1, h, w = x_nchw.shape
    c2, c1w, kh_, kw_ = weight.shape
    assert kh_ == kw_, "square kernels only"
    ks = kh_
    assert groups == 1, "grouped conv not implemented"   # TODO(synk): groups > 1
    assert c1w == c1
    # TODO(synk): padding > "same" (2p > d*(ks-1)) needs an extended flat buffer.
    assert 2 * padding <= dilation * (ks - 1) or ks == 1

    hw = h * w
    ho1 = h + 2 * padding - dilation * (ks - 1)           # stride-1 output height
    wo1 = w + 2 * padding - dilation * (ks - 1)
    k = ks * ks * c1

    # Per-tap lane shifts and validity masks (pure host-side constants).
    jj = np.arange(hw, dtype=np.int64)
    rr = jj // w
    cc = jj % w
    shifts = []
    mask_rows = []
    for kh in range(ks):
        for kw in range(ks):
            delta = (kh * dilation - padding) * w + (kw * dilation - padding)
            shifts.append(int((-delta) % hw))
            ri = rr + (kh * dilation - padding)
            ci = cc + (kw * dilation - padding)
            mask_rows.append((ri >= 0) & (ri < h) & (ci >= 0) & (ci < w))
    masks = jnp.asarray(np.stack(mask_rows), dtype=x_nchw.dtype)   # (ks*ks, hw)

    # Tiny one-off weight/bias re-layout: OIHW -> (C2, KS*KS*C1), tap-major so
    # it matches the im2col row order [tap0: c1 rows, tap1: c1 rows, ...].
    w2 = jnp.transpose(weight, (0, 2, 3, 1)).reshape(c2, k)
    b2 = bias.reshape(c2, 1).astype(jnp.float32)

    # Batch-block size: largest divisor of N that is <= 8. Amortizes per-step
    # grid overhead; keeps the single grid axis "parallel" for megacore/2-TC.
    nb = max(d for d in range(1, min(n, 8) + 1) if n % d == 0)

    x_flat = x_nchw.reshape(n, c1, hw)                    # free view, contiguous DMA

    kernel = functools.partial(_repconv_kernel, nb=nb, shifts=tuple(shifts),
                               use_act=use_act)

    itemsize = jnp.dtype(x_nchw.dtype).itemsize
    flops = 2 * n * c2 * k * hw + 2 * n * c2 * hw
    bytes_accessed = (n * c1 * hw + n * c2 * hw) * itemsize + (w2.size + masks.size) * itemsize + b2.size * 4

    # TODO(synk): for large images add spatial row-tiling with halo so the
    # per-step block stays within v7x's 64 MiB VMEM (re-derive tile per chip).
    y_flat = pl.pallas_call(
        kernel,
        out_shape=jax.ShapeDtypeStruct((n, c2, hw), x_nchw.dtype),
        grid_spec=pltpu.PrefetchScalarGridSpec(
            num_scalar_prefetch=0,
            grid=(n // nb,),
            in_specs=[
                pl.BlockSpec((nb, c1, hw), lambda i: (i, 0, 0)),
                pl.BlockSpec((c2, k), lambda i: (0, 0)),
                pl.BlockSpec((c2, 1), lambda i: (0, 0)),
                pl.BlockSpec((ks * ks, hw), lambda i: (0, 0)),
            ],
            out_specs=pl.BlockSpec((nb, c2, hw), lambda i: (i, 0, 0)),
        ),
        compiler_params=pltpu.CompilerParams(
            dimension_semantics=("parallel",)),
        cost_estimate=pl.CostEstimate(flops=flops, transcendentals=0,
                                      bytes_accessed=bytes_accessed),
    )(x_flat, w2, b2, masks)

    # Layout plumbing only: strip the stride-1 overhang columns/rows (no-op for
    # "same" padding) and subsample for stride > 1.
    y = y_flat.reshape(n, c2, h, w)[:, :, :ho1, :wo1]
    if stride > 1:
        # TODO(synk): stride>1 computes the dense stride-1 output then
        # subsamples (correct, but ~stride^2 extra MXU work).
        y = y[:, :, ::stride, ::stride]
    return y


if __name__ == "__main__":
    # Module config: c1=4, c2=8, ks=3, stride=1, padding=1, dilation=1, groups=1
    N, C1, C2, H, W, KS = 2, 4, 8, 16, 16, 3
    STRIDE, PAD, DIL = 1, 1, 1

    key = jax.random.PRNGKey(0)
    kx, kwt, kb = jax.random.split(key, 3)
    x = jax.random.normal(kx, (N, C1, H, W), dtype=jnp.float32)
    weight = jax.random.normal(kwt, (C2, C1, KS, KS), dtype=jnp.float32) * 0.1
    bias = jax.random.normal(kb, (C2,), dtype=jnp.float32) * 0.1

    y = repconv_forward(x, weight, bias, stride=STRIDE, padding=PAD,
                        dilation=DIL, groups=1, use_act=True)
    y = jax.block_until_ready(y)

    # Reference check (pure JAX conv + bias + ReLU), same NCHW semantics as PyTorch.
    ref = lax.conv_general_dilated(
        x, weight, window_strides=(STRIDE, STRIDE),
        padding=[(PAD, PAD), (PAD, PAD)],
        rhs_dilation=(DIL, DIL),
        dimension_numbers=("NCHW", "OIHW", "NCHW"),
        precision=lax.Precision.HIGHEST)
    ref = jnp.maximum(ref + bias[None, :, None, None], 0.0)
    assert y.shape == ref.shape == (N, C2, H, W)
    err = float(jnp.max(jnp.abs(y - ref)))
    assert jnp.allclose(y, ref, atol=2e-3, rtol=2e-3), f"max abs err {err}"

    print("KERNEL_OK")
</pallas_src>

<mosaic_0001>
module attributes {stable_mosaic.version = 11 : i64} {
  func.func @_repconv_kernel(%arg0: i32, %arg1: memref<2x4x256xf32, #tpu.memory_space<vmem>>, %arg2: memref<8x36xf32, #tpu.memory_space<vmem>>, %arg3: memref<8x1xf32, #tpu.memory_space<vmem>>, %arg4: memref<9x256xf32, #tpu.memory_space<vmem>>, %arg5: memref<2x8x256xf32, #tpu.memory_space<vmem>>) attributes {dimension_semantics = [#tpu.dimension_semantics<parallel>], iteration_bounds = array<i64: 1>, scalar_prefetch = 0 : i64, scratch_operands = 0 : i64, tpu.core_type = #tpu.core_type<tc>, window_params = [{transform_indices = @transform_0, window_bounds = array<i64: 2, 4, 256>}, {pipeline_mode = #tpu.pipeline_mode<synchronous>, transform_indices = @transform_1, window_bounds = array<i64: 8, 36>}, {pipeline_mode = #tpu.pipeline_mode<synchronous>, transform_indices = @transform_2, window_bounds = array<i64: 8, 1>}, {pipeline_mode = #tpu.pipeline_mode<synchronous>, transform_indices = @transform_3, window_bounds = array<i64: 9, 256>}, {transform_indices = @transform_4, window_bounds = array<i64: 2, 8, 256>}]} {
    %c0 = arith.constant 0 : index
    %c0_0 = arith.constant 0 : index
    %0 = vector.load %arg2[%c0, %c0_0] : memref<8x36xf32, #tpu.memory_space<vmem>>, vector<8x36xf32>
    %c0_1 = arith.constant 0 : index
    %c0_2 = arith.constant 0 : index
    %1 = vector.load %arg3[%c0_1, %c0_2] : memref<8x1xf32, #tpu.memory_space<vmem>>, vector<8x1xf32>
    %c0_3 = arith.constant 0 : index
    %c0_4 = arith.constant 0 : index
    %2 = vector.load %arg4[%c0_3, %c0_4] : memref<9x256xf32, #tpu.memory_space<vmem>>, vector<9x256xf32>
    %3 = vector.extract_strided_slice %2 {offsets = [0, 0], sizes = [1, 256], strides = [1, 1]} : vector<9x256xf32> to vector<1x256xf32>
    %cst = arith.constant 0.000000e+00 : f32
    %4 = vector.broadcast %cst : f32 to vector<1x256xf32>
    %5 = arith.cmpf one, %3, %4 : vector<1x256xf32>
    %6 = vector.extract_strided_slice %2 {offsets = [1, 0], sizes = [1, 256], strides = [1, 1]} : vector<9x256xf32> to vector<1x256xf32>
    %cst_5 = arith.constant 0.000000e+00 : f32
    %7 = vector.broadcast %cst_5 : f32 to vector<1x256xf32>
    %8 = arith.cmpf one, %6, %7 : vector<1x256xf32>
    %9 = vector.extract_strided_slice %2 {offsets = [2, 0], sizes = [1, 256], strides = [1, 1]} : vector<9x256xf32> to vector<1x256xf32>
    %cst_6 = arith.constant 0.000000e+00 : f32
    %10 = vector.broadcast %cst_6 : f32 to vector<1x256xf32>
    %11 = arith.cmpf one, %9, %10 : vector<1x256xf32>
    %12 = vector.extract_strided_slice %2 {offsets = [3, 0], sizes = [1, 256], strides = [1, 1]} : vector<9x256xf32> to vector<1x256xf32>
    %cst_7 = arith.constant 0.000000e+00 : f32
    %13 = vector.broadcast %cst_7 : f32 to vector<1x256xf32>
    %14 = arith.cmpf one, %12, %13 : vector<1x256xf32>
    %15 = vector.extract_strided_slice %2 {offsets = [4, 0], sizes = [1, 256], strides = [1, 1]} : vector<9x256xf32> to vector<1x256xf32>
    %cst_8 = arith.constant 0.000000e+00 : f32
    %16 = vector.broadcast %cst_8 : f32 to vector<1x256xf32>
    %17 = arith.cmpf one, %15, %16 : vector<1x256xf32>
    %18 = vector.extract_strided_slice %2 {offsets = [5, 0], sizes = [1, 256], strides = [1, 1]} : vector<9x256xf32> to vector<1x256xf32>
    %cst_9 = arith.constant 0.000000e+00 : f32
    %19 = vector.broadcast %cst_9 : f32 to vector<1x256xf32>
    %20 = arith.cmpf one, %18, %19 : vector<1x256xf32>
    %21 = vector.extract_strided_slice %2 {offsets = [6, 0], sizes = [1, 256], strides = [1, 1]} : vector<9x256xf32> to vector<1x256xf32>
    %cst_10 = arith.constant 0.000000e+00 : f32
    %22 = vector.broadcast %cst_10 : f32 to vector<1x256xf32>
    %23 = arith.cmpf one, %21, %22 : vector<1x256xf32>
    %24 = vector.extract_strided_slice %2 {offsets = [7, 0], sizes = [1, 256], strides = [1, 1]} : vector<9x256xf32> to vector<1x256xf32>
    %cst_11 = arith.constant 0.000000e+00 : f32
    %25 = vector.broadcast %cst_11 : f32 to vector<1x256xf32>
    %26 = arith.cmpf one, %24, %25 : vector<1x256xf32>
    %27 = vector.extract_strided_slice %2 {offsets = [8, 0], sizes = [1, 256], strides = [1, 1]} : vector<9x256xf32> to vector<1x256xf32>
    %cst_12 = arith.constant 0.000000e+00 : f32
    %28 = vector.broadcast %cst_12 : f32 to vector<1x256xf32>
    %29 = arith.cmpf one, %27, %28 : vector<1x256xf32>
    %c0_13 = arith.constant 0 : index
    %c0_14 = arith.constant 0 : index
    %c0_15 = arith.constant 0 : index
    %30 = vector.load %arg1[%c0_13, %c0_14, %c0_15] : memref<2x4x256xf32, #tpu.memory_space<vmem>>, vector<1x4x256xf32>
    %31 = vector.shape_cast %30 : vector<1x4x256xf32> to vector<4x256xf32>
    %c17_i32 = arith.constant 17 : i32
    %32 = tpu.dynamic_rotate %31 by %c17_i32 dim 1 : vector<4x256xf32>, i32 -> vector<4x256xf32>
    %cst_16 = arith.constant 0.000000e+00 : f32
    %33 = vector.shape_cast %5 : vector<1x256xi1> to vector<1x256xi1>
    %34 = vector.broadcast %33 : vector<1x256xi1> to vector<4x256xi1>
    %35 = vector.broadcast %cst_16 : f32 to vector<4x256xf32>
    %36 = arith.select %34, %32, %35 : vector<4x256xi1>, vector<4x256xf32>
    %c16_i32 = arith.constant 16 : i32
    %37 = tpu.dynamic_rotate %31 by %c16_i32 dim 1 : vector<4x256xf32>, i32 -> vector<4x256xf32>
    %cst_17 = arith.constant 0.000000e+00 : f32
    %38 = vector.shape_cast %8 : vector<1x256xi1> to vector<1x256xi1>
    %39 = vector.broadcast %38 : vector<1x256xi1> to vector<4x256xi1>
    %40 = vector.broadcast %cst_17 : f32 to vector<4x256xf32>
    %41 = arith.select %39, %37, %40 : vector<4x256xi1>, vector<4x256xf32>
    %c15_i32 = arith.constant 15 : i32
    %42 = tpu.dynamic_rotate %31 by %c15_i32 dim 1 : vector<4x256xf32>, i32 -> vector<4x256xf32>
    %cst_18 = arith.constant 0.000000e+00 : f32
    %43 = vector.shape_cast %11 : vector<1x256xi1> to vector<1x256xi1>
    %44 = vector.broadcast %43 : vector<1x256xi1> to vector<4x256xi1>
    %45 = vector.broadcast %cst_18 : f32 to vector<4x256xf32>
    %46 = arith.select %44, %42, %45 : vector<4x256xi1>, vector<4x256xf32>
    %c1_i32 = arith.constant 1 : i32
    %47 = tpu.dynamic_rotate %31 by %c1_i32 dim 1 : vector<4x256xf32>, i32 -> vector<4x256xf32>
    %cst_19 = arith.constant 0.000000e+00 : f32
    %48 = vector.shape_cast %14 : vector<1x256xi1> to vector<1x256xi1>
    %49 = vector.broadcast %48 : vector<1x256xi1> to vector<4x256xi1>
    %50 = vector.broadcast %cst_19 : f32 to vector<4x256xf32>
    %51 = arith.select %49, %47, %50 : vector<4x256xi1>, vector<4x256xf32>
    %cst_20 = arith.constant 0.000000e+00 : f32
    %52 = vector.shape_cast %17 : vector<1x256xi1> to vector<1x256xi1>
    %53 = vector.broadcast %52 : vector<1x256xi1> to vector<4x256xi1>
    %54 = vector.broadcast %cst_20 : f32 to vector<4x256xf32>
    %55 = arith.select %53, %31, %54 : vector<4x256xi1>, vector<4x256xf32>
    %c255_i32 = arith.constant 255 : i32
    %56 = tpu.dynamic_rotate %31 by %c255_i32 dim 1 : vector<4x256xf32>, i32 -> vector<4x256xf32>
    %cst_21 = arith.constant 0.000000e+00 : f32
    %57 = vector.shape_cast %20 : vector<1x256xi1> to vector<1x256xi1>
    %58 = vector.broadcast %57 : vector<1x256xi1> to vector<4x256xi1>
    %59 = vector.broadcast %cst_21 : f32 to vector<4x256xf32>
    %60 = arith.select %58, %56, %59 : vector<4x256xi1>, vector<4x256xf32>
    %c241_i32 = arith.constant 241 : i32
    %61 = tpu.dynamic_rotate %31 by %c241_i32 dim 1 : vector<4x256xf32>, i32 -> vector<4x256xf32>
    %cst_22 = arith.constant 0.000000e+00 : f32
    %62 = vector.shape_cast %23 : vector<1x256xi1> to vector<1x256xi1>
    %63 = vector.broadcast %62 : vector<1x256xi1> to vector<4x256xi1>
    %64 = vector.broadcast %cst_22 : f32 to vector<4x256xf32>
    %65 = arith.select %63, %61, %64 : vector<4x256xi1>, vector<4x256xf32>
    %c240_i32 = arith.constant 240 : i32
    %66 = tpu.dynamic_rotate %31 by %c240_i32 dim 1 : vector<4x256xf32>, i32 -> vector<4x256xf32>
    %cst_23 = arith.constant 0.000000e+00 : f32
    %67 = vector.shape_cast %26 : vector<1x256xi1> to vector<1x256xi1>
    %68 = vector.broadcast %67 : vector<1x256xi1> to vector<4x256xi1>
    %69 = vector.broadcast %cst_23 : f32 to vector<4x256xf32>
    %70 = arith.select %68, %66, %69 : vector<4x256xi1>, vector<4x256xf32>
    %c239_i32 = arith.constant 239 : i32
    %71 = tpu.dynamic_rotate %31 by %c239_i32 dim 1 : vector<4x256xf32>, i32 -> vector<4x256xf32>
    %cst_24 = arith.constant 0.000000e+00 : f32
    %72 = vector.shape_cast %29 : vector<1x256xi1> to vector<1x256xi1>
    %73 = vector.broadcast %72 : vector<1x256xi1> to vector<4x256xi1>
    %74 = vector.broadcast %cst_24 : f32 to vector<4x256xf32>
    %75 = arith.select %73, %71, %74 : vector<4x256xi1>, vector<4x256xf32>
    %76 = tpu.concatenate %36, %41, %46, %51, %55, %60, %65, %70, %75 in 0 : vector<4x256xf32>, vector<4x256xf32>, vector<4x256xf32>, vector<4x256xf32>, vector<4x256xf32>, vector<4x256xf32>, vector<4x256xf32>, vector<4x256xf32>, vector<4x256xf32> -> vector<36x256xf32>
    %cst_25 = arith.constant dense<0.000000e+00> : vector<8x256xf32>
    %77 = tpu.matmul %0, %76, %cst_25 {dimension_numbers = #tpu.dot_dimension_numbers<[1], [0], [0], [1], [0, 0, 1, 1], [], []>, precision = #tpu.contract_precision<fp32>} : vector<8x36xf32>, vector<36x256xf32>, vector<8x256xf32> -> vector<8x256xf32>
    %78 = vector.broadcast %1 : vector<8x1xf32> to vector<8x256xf32>
    %79 = arith.addf %77, %78 : vector<8x256xf32>
    %cst_26 = arith.constant 0.000000e+00 : f32
    %80 = vector.broadcast %cst_26 : f32 to vector<8x256xf32>
    %81 = arith.maximumf %79, %80 : vector<8x256xf32>
    %c0_27 = arith.constant 0 : index
    %c0_28 = arith.constant 0 : index
    %c0_29 = arith.constant 0 : index
    %82 = vector.load %arg5[%c0_27, %c0_28, %c0_29] : memref<2x8x256xf32, #tpu.memory_space<vmem>>, vector<1x8x256xf32>
    %83 = vector.shape_cast %82 : vector<1x8x256xf32> to vector<8x256xf32>
    %84 = vector.shape_cast %81 : vector<8x256xf32> to vector<1x8x256xf32>
    tpu.vector_store %arg5[%c0_27, %c0_28, %c0_29], %84 {strides = array<i32>} : memref<2x8x256xf32, #tpu.memory_space<vmem>>, vector<1x8x256xf32>,
    %c1 = arith.constant 1 : index
    %c0_30 = arith.constant 0 : index
    %c0_31 = arith.constant 0 : index
    %85 = vector.load %arg1[%c1, %c0_30, %c0_31] : memref<2x4x256xf32, #tpu.memory_space<vmem>>, vector<1x4x256xf32>
    %86 = vector.shape_cast %85 : vector<1x4x256xf32> to vector<4x256xf32>
    %c17_i32_32 = arith.constant 17 : i32
    %87 = tpu.dynamic_rotate %86 by %c17_i32_32 dim 1 : vector<4x256xf32>, i32 -> vector<4x256xf32>
    %cst_33 = arith.constant 0.000000e+00 : f32
    %88 = vector.shape_cast %5 : vector<1x256xi1> to vector<1x256xi1>
    %89 = vector.broadcast %88 : vector<1x256xi1> to vector<4x256xi1>
    %90 = vector.broadcast %cst_33 : f32 to vector<4x256xf32>
    %91 = arith.select %89, %87, %90 : vector<4x256xi1>, vector<4x256xf32>
    %c16_i32_34 = arith.constant 16 : i32
    %92 = tpu.dynamic_rotate %86 by %c16_i32_34 dim 1 : vector<4x256xf32>, i32 -> vector<4x256xf32>
    %cst_35 = arith.constant 0.000000e+00 : f32
    %93 = vector.shape_cast %8 : vector<1x256xi1> to vector<1x256xi1>
    %94 = vector.broadcast %93 : vector<1x256xi1> to vector<4x256xi1>
    %95 = vector.broadcast %cst_35 : f32 to vector<4x256xf32>
    %96 = arith.select %94, %92, %95 : vector<4x256xi1>, vector<4x256xf32>
    %c15_i32_36 = arith.constant 15 : i32
    %97 = tpu.dynamic_rotate %86 by %c15_i32_36 dim 1 : vector<4x256xf32>, i32 -> vector<4x256xf32>
    %cst_37 = arith.constant 0.000000e+00 : f32
    %98 = vector.shape_cast %11 : vector<1x256xi1> to vector<1x256xi1>
    %99 = vector.broadcast %98 : vector<1x256xi1> to vector<4x256xi1>
    %100 = vector.broadcast %cst_37 : f32 to vector<4x256xf32>
    %101 = arith.select %99, %97, %100 : vector<4x256xi1>, vector<4x256xf32>
    %c1_i32_38 = arith.constant 1 : i32
    %102 = tpu.dynamic_rotate %86 by %c1_i32_38 dim 1 : vector<4x256xf32>, i32 -> vector<4x256xf32>
    %cst_39 = arith.constant 0.000000e+00 : f32
    %103 = vector.shape_cast %14 : vector<1x256xi1> to vector<1x256xi1>
    %104 = vector.broadcast %103 : vector<1x256xi1> to vector<4x256xi1>
    %105 = vector.broadcast %cst_39 : f32 to vector<4x256xf32>
    %106 = arith.select %104, %102, %105 : vector<4x256xi1>, vector<4x256xf32>
    %cst_40 = arith.constant 0.000000e+00 : f32
    %107 = vector.shape_cast %17 : vector<1x256xi1> to vector<1x256xi1>
    %108 = vector.broadcast %107 : vector<1x256xi1> to vector<4x256xi1>
    %109 = vector.broadcast %cst_40 : f32 to vector<4x256xf32>
    %110 = arith.select %108, %86, %109 : vector<4x256xi1>, vector<4x256xf32>
    %c255_i32_41 = arith.constant 255 : i32
    %111 = tpu.dynamic_rotate %86 by %c255_i32_41 dim 1 : vector<4x256xf32>, i32 -> vector<4x256xf32>
    %cst_42 = arith.constant 0.000000e+00 : f32
    %112 = vector.shape_cast %20 : vector<1x256xi1> to vector<1x256xi1>
    %113 = vector.broadcast %112 : vector<1x256xi1> to vector<4x256xi1>
    %114 = vector.broadcast %cst_42 : f32 to vector<4x256xf32>
    %115 = arith.select %113, %111, %114 : vector<4x256xi1>, vector<4x256xf32>
    %c241_i32_43 = arith.constant 241 : i32
    %116 = tpu.dynamic_rotate %86 by %c241_i32_43 dim 1 : vector<4x256xf32>, i32 -> vector<4x256xf32>
    %cst_44 = arith.constant 0.000000e+00 : f32
    %117 = vector.shape_cast %23 : vector<1x256xi1> to vector<1x256xi1>
    %118 = vector.broadcast %117 : vector<1x256xi1> to vector<4x256xi1>
    %119 = vector.broadcast %cst_44 : f32 to vector<4x256xf32>
    %120 = arith.select %118, %116, %119 : vector<4x256xi1>, vector<4x256xf32>
    %c240_i32_45 = arith.constant 240 : i32
    %121 = tpu.dynamic_rotate %86 by %c240_i32_45 dim 1 : vector<4x256xf32>, i32 -> vector<4x256xf32>
    %cst_46 = arith.constant 0.000000e+00 : f32
    %122 = vector.shape_cast %26 : vector<1x256xi1> to vector<1x256xi1>
    %123 = vector.broadcast %122 : vector<1x256xi1> to vector<4x256xi1>
    %124 = vector.broadcast %cst_46 : f32 to vector<4x256xf32>
    %125 = arith.select %123, %121, %124 : vector<4x256xi1>, vector<4x256xf32>
    %c239_i32_47 = arith.constant 239 : i32
    %126 = tpu.dynamic_rotate %86 by %c239_i32_47 dim 1 : vector<4x256xf32>, i32 -> vector<4x256xf32>
    %cst_48 = arith.constant 0.000000e+00 : f32
    %127 = vector.shape_cast %29 : vector<1x256xi1> to vector<1x256xi1>
    %128 = vector.broadcast %127 : vector<1x256xi1> to vector<4x256xi1>
    %129 = vector.broadcast %cst_48 : f32 to vector<4x256xf32>
    %130 = arith.select %128, %126, %129 : vector<4x256xi1>, vector<4x256xf32>
    %131 = tpu.concatenate %91, %96, %101, %106, %110, %115, %120, %125, %130 in 0 : vector<4x256xf32>, vector<4x256xf32>, vector<4x256xf32>, vector<4x256xf32>, vector<4x256xf32>, vector<4x256xf32>, vector<4x256xf32>, vector<4x256xf32>, vector<4x256xf32> -> vector<36x256xf32>
    %cst_49 = arith.constant dense<0.000000e+00> : vector<8x256xf32>
    %132 = tpu.matmul %0, %131, %cst_49 {dimension_numbers = #tpu.dot_dimension_numbers<[1], [0], [0], [1], [0, 0, 1, 1], [], []>, precision = #tpu.contract_precision<fp32>} : vector<8x36xf32>, vector<36x256xf32>, vector<8x256xf32> -> vector<8x256xf32>
    %133 = vector.broadcast %1 : vector<8x1xf32> to vector<8x256xf32>
    %134 = arith.addf %132, %133 : vector<8x256xf32>
    %cst_50 = arith.constant 0.000000e+00 : f32
    %135 = vector.broadcast %cst_50 : f32 to vector<8x256xf32>
    %136 = arith.maximumf %134, %135 : vector<8x256xf32>
    %c1_51 = arith.constant 1 : index
    %c0_52 = arith.constant 0 : index
    %c0_53 = arith.constant 0 : index
    %137 = vector.load %arg5[%c1_51, %c0_52, %c0_53] : memref<2x8x256xf32, #tpu.memory_space<vmem>>, vector<1x8x256xf32>
    %138 = vector.shape_cast %137 : vector<1x8x256xf32> to vector<8x256xf32>
    %139 = vector.shape_cast %136 : vector<8x256xf32> to vector<1x8x256xf32>
    tpu.vector_store %arg5[%c1_51, %c0_52, %c0_53], %139 {strides = array<i32>} : memref<2x8x256xf32, #tpu.memory_space<vmem>>, vector<1x8x256xf32>,
    return
  }
  func.func @transform_0(%arg0: i32) -> (i32, i32, i32) {
    %c0_i32 = arith.constant 0 : i32
    %c0_i32_0 = arith.constant 0 : i32
    %c0_i32_1 = arith.constant 0 : i32
    return %arg0, %c0_i32, %c0_i32_0 : i32, i32, i32
  }
  func.func @transform_1(%arg0: i32) -> (i32, i32) {
    %c0_i32 = arith.constant 0 : i32
    %c0_i32_0 = arith.constant 0 : i32
    %c0_i32_1 = arith.constant 0 : i32
    return %c0_i32, %c0_i32_0 : i32, i32
  }
  func.func @transform_2(%arg0: i32) -> (i32, i32) {
    %c0_i32 = arith.constant 0 : i32
    %c0_i32_0 = arith.constant 0 : i32
    %c0_i32_1 = arith.constant 0 : i32
    return %c0_i32, %c0_i32_0 : i32, i32
  }
  func.func @transform_3(%arg0: i32) -> (i32, i32) {
    %c0_i32 = arith.constant 0 : i32
    %c0_i32_0 = arith.constant 0 : i32
    %c0_i32_1 = arith.constant 0 : i32
    return %c0_i32, %c0_i32_0 : i32, i32
  }
  func.func @transform_4(%arg0: i32) -> (i32, i32, i32) {
    %c0_i32 = arith.constant 0 : i32
    %c0_i32_0 = arith.constant 0 : i32
    %c0_i32_1 = arith.constant 0 : i32
    return %arg0, %c0_i32, %c0_i32_0 : i32, i32, i32
  }
}

</mosaic_0001>

<llo_original>
// kernel: tpu_custom_call.1
$region0: #{tpu_custom_call.1}
  #allocation0 [shape = 'u32[]', space=smem, size = 0x4, offset = 0x4, fixed_abs, tag = 'smem constant byte address 0x4 - core index']
  #allocation1 [shape = 'u32[72,128]{1,0:T(1,128)}', space=vmem, size = 0x9000, scoped, tag = 'internal scratch']
  %s0 = inlined_call_operand.hbm [shape: f32[2,4,256], index: 0, kind: input, shape index: {}]
  %s1 = inlined_call_operand.vmem [shape: f32[8,36], index: 1, kind: input, shape index: {}]
  %s2 = inlined_call_operand.vmem [shape: f32[8,1], index: 2, kind: input, shape index: {}]
  %s3 = inlined_call_operand.hbm [shape: f32[9,256], index: 3, kind: input, shape index: {}]
  %s4 = inlined_call_operand.hbm [shape: f32[2,8,256], index: 4, kind: output, shape index: {}]
  %s5 = sld [smem:[#allocation0]]
  $region34: #{tpu_custom_call.1} parent=0
    _
  %s7 = ssub.s32 1, %s5
  %s8 = scalar_select 0, %s7, %s5
  $region1: #{tpu_custom_call.1} parent=0
    #allocation2 [shape = 'u8[8192]{0}', space=vmem, size = 0x2000, scoped, tag = 'input window, operand 0, single buffered']
    #allocation3 [shape = 's32[1]{0}', space=sflag, size = 0x4, scoped, tag = 'scoped memory for tpu_custom_call.1']
    #allocation4 [shape = 's32[1]{0}', space=sflag, size = 0x4, scoped, tag = 'scoped memory for tpu_custom_call.1']
    #allocation5 [shape = 'u8[16384]{0}', space=vmem, size = 0x4000, scoped, tag = 'input window, operand 3, single buffered']
    #allocation6 [shape = 's32[1]{0}', space=sflag, size = 0x4, scoped, tag = 'scoped memory for tpu_custom_call.1']
    #allocation7 [shape = 'u8[16384]{0}', space=vmem, size = 0x4000, scoped, tag = 'output window, operand 0, single buffered']
    %9 = vsyncpa [#allocation3], 0
    %10 = vsyncpa [#allocation6], 0
    %11 = vsyncpa [#allocation4], 0
    // Predicated region
    $region2: #{tpu_custom_call.1} parent=1 // pred_check
      _
    $region3: #{tpu_custom_call.1} parent=1 // pred_check_branch
      %13 = sbr.rel (0) target = $region5
    $region4: #{tpu_custom_call.1} parent=1 // pred_region
      %15 = vsyncadd [#allocation3], 0
      %s16 = sshll.u32 %s0, 4
      %s17 = int_to_ptr.hbm [resolvable:$true] %s16
      %s18 = sshll.u32 [#allocation2], 4
      %s19 = int_to_ptr.vmem [resolvable:$true] %s18
      %24 = dma.hbm_to_vmem [thread:$0]  %s17, 256, %s19, [#allocation3], 128, 128, 8
    $region5: #{tpu_custom_call.1} parent=1 // pred_fallthru
      _
    // Predicated region
    $region6: #{tpu_custom_call.1} parent=1 // pred_check
      _
    $region7: #{tpu_custom_call.1} parent=1 // pred_check_branch
      %26 = sbr.rel (0) target = $region9
    $region8: #{tpu_custom_call.1} parent=1 // pred_region
      _
    $region9: #{tpu_custom_call.1} parent=1 // pred_fallthru
      _
    // Predicated region
    $region10: #{tpu_custom_call.1} parent=1 // pred_check
      _
    $region11: #{tpu_custom_call.1} parent=1 // pred_check_branch
      %28 = sbr.rel (0) target = $region13
    $region12: #{tpu_custom_call.1} parent=1 // pred_region
      _
    $region13: #{tpu_custom_call.1} parent=1 // pred_fallthru
      _
    // Predicated region
    $region14: #{tpu_custom_call.1} parent=1 // pred_check
      _
    $region15: #{tpu_custom_call.1} parent=1 // pred_check_branch
      %30 = sbr.rel (0) target = $region17
    $region16: #{tpu_custom_call.1} parent=1 // pred_region
      %32 = vsyncadd [#allocation6], 0
      %s33 = sshll.u32 %s3, 4
      %s34 = int_to_ptr.hbm [resolvable:$true] %s33
      %s35 = sshll.u32 [#allocation5], 4
      %s36 = int_to_ptr.vmem [resolvable:$true] %s35
      %41 = dma.hbm_to_vmem [thread:$0]  %s34, 512, %s36, [#allocation6], 256, 256, 16
    $region17: #{tpu_custom_call.1} parent=1 // pred_fallthru
      _
    // Predicated region
    $region18: #{tpu_custom_call.1} parent=1 // pred_check
      _
    $region19: #{tpu_custom_call.1} parent=1 // pred_check_branch
      %43 = sbr.rel (0) target = $region21
    $region20: #{tpu_custom_call.1} parent=1 // pred_region
      %45 = dma.done [#allocation3], 256
    $region21: #{tpu_custom_call.1} parent=1 // pred_fallthru
      _
    // Predicated region
    $region22: #{tpu_custom_call.1} parent=1 // pred_check
      _
    $region23: #{tpu_custom_call.1} parent=1 // pred_check_branch
      %47 = sbr.rel (0) target = $region25
    $region24: #{tpu_custom_call.1} parent=1 // pred_region
      %49 = dma.done [#allocation6], 512
    $region25: #{tpu_custom_call.1} parent=1 // pred_fallthru
      _
    %v50 = vld [vmem:[%s1] sm:$0xff]
    %v51 = vld [vmem:[%s2] sm:$0xff]
    %v52 = vld [vmem:[#allocation5] sm:$0xff]
    %v53 = vld [vmem:[#allocation5 + $0x8] sm:$0xff]
    %v54 = vld [vmem:[#allocation5 + $0x10] sm:$0x1]
    %v55 = vld [vmem:[#allocation5 + $0x18] sm:$0x1]
    %vm56 = vcmp.ne.f32.partialorder %v52, 0.0
    %vm57 = vcmp.ne.f32.partialorder %v53, 0.0
    %vm58 = vcmp.ne.f32.partialorder %v54, 0.0
    %vm59 = vcmp.ne.f32.partialorder %v55, 0.0
    %v60 = vld [vmem:[#allocation2] sm:$0xff]
    %62 = vst [vmem:[#allocation1] ss:$2 sm:$0xff] %v60
    %v63 = vld.sshfl [vmem:[#allocation1] sm:$0xff pattern:$0x75316420]
    %v64 = vld.sshfl [vmem:[#allocation1 + $0x8] sm:$0xff pattern:$0x75316420]
    %67 = vrot.lane.b32.xlu0 %v63, 17
    %v68 = vpop.permute.xlu0 %67
    %69 = vrot.lane.b32.xlu0 %v64, 17
    %v70 = vpop.permute.xlu0 %69
    %v71 = vlaneseq
    %v72 = vand.u32 %v71, 127
    %vm73 = vcmp.lt.s32.totalorder %v72, 17
    %v74 = vsel %vm73, %v68, %v70
    %v75 = vsel %vm73, %v70, %v68
    %v76 = vsel %vm56, 1, 0
    %v77 = vsel %vm57, 1, 0
    %v78 = vperm.slane %v76, 0
    %v79 = vperm.slane %v77, 0
    %vm80 = vcmp.eq.s32.totalorder %v78, 1
    %vm81 = vcmp.eq.s32.totalorder %v79, 1
    %v82 = vsel %vm80, %v75, 0.0
    %v83 = vsel %vm81, %v74, 0.0
    %84 = vst [vmem:[#allocation1] ss:$2 sm:$0xff] %v60
    %v85 = vld.sshfl [vmem:[#allocation1] sm:$0xff pattern:$0x75316420]
    %v86 = vld.sshfl [vmem:[#allocation1 + $0x8] sm:$0xff pattern:$0x75316420]
    %89 = vrot.lane.b32.xlu0 %v85, 16
    %v90 = vpop.permute.xlu0 %89
    %91 = vrot.lane.b32.xlu0 %v86, 16
    %v92 = vpop.permute.xlu0 %91
    %vm93 = vcmp.lt.s32.totalorder %v72, 16
    %v94 = vsel %vm93, %v90, %v92
    %v95 = vsel %vm93, %v92, %v90
    %v96 = vperm.slane %v76, 1
    %v97 = vperm.slane %v77, 1
    %vm98 = vcmp.eq.s32.totalorder %v96, 1
    %vm99 = vcmp.eq.s32.totalorder %v97, 1
    %v100 = vsel %vm98, %v95, 0.0
    %v101 = vsel %vm99, %v94, 0.0
    %102 = vst [vmem:[#allocation1] ss:$2 sm:$0xff] %v60
    %v103 = vld.sshfl [vmem:[#allocation1] sm:$0xff pattern:$0x75316420]
    %v104 = vld.sshfl [vmem:[#allocation1 + $0x8] sm:$0xff pattern:$0x75316420]
    %107 = vrot.lane.b32.xlu0 %v103, 15
    %v108 = vpop.permute.xlu0 %107
    %109 = vrot.lane.b32.xlu0 %v104, 15
    %v110 = vpop.permute.xlu0 %109
    %vm111 = vcmp.lt.s32.totalorder %v72, 15
    %v112 = vsel %vm111, %v108, %v110
    %v113 = vsel %vm111, %v110, %v108
    %v114 = vperm.slane %v76, 2
    %v115 = vperm.slane %v77, 2
    %vm116 = vcmp.eq.s32.totalorder %v114, 1
    %vm117 = vcmp.eq.s32.totalorder %v115, 1
    %v118 = vsel %vm116, %v113, 0.0
    %v119 = vsel %vm117, %v112, 0.0
    %120 = vst [vmem:[#allocation1] ss:$2 sm:$0xff] %v60
    %v121 = vld.sshfl [vmem:[#allocation1] sm:$0xff pattern:$0x75316420]
    %v122 = vld.sshfl [vmem:[#allocation1 + $0x8] sm:$0xff pattern:$0x75316420]
    %125 = vrot.lane.b32.xlu0 %v121, 1
    %v126 = vpop.permute.xlu0 %125
    %127 = vrot.lane.b32.xlu0 %v122, 1
    %v128 = vpop.permute.xlu0 %127
    %vm129 = vcmp.lt.s32.totalorder %v72, 1
    %v130 = vsel %vm129, %v126, %v128
    %v131 = vsel %vm129, %v128, %v126
    %v132 = vperm.slane %v76, 3
    %v133 = vperm.slane %v77, 3
    %vm134 = vcmp.eq.s32.totalorder %v132, 1
    %vm135 = vcmp.eq.s32.totalorder %v133, 1
    %v136 = vsel %vm134, %v131, 0.0
    %v137 = vsel %vm135, %v130, 0.0
    %v138 = vperm.slane %v76, 4
    %v139 = vperm.slane %v77, 4
    %vm140 = vcmp.eq.s32.totalorder %v138, 1
    %vm141 = vcmp.eq.s32.totalorder %v139, 1
    %142 = vst [vmem:[#allocation1] ss:$2 sm:$0xff] %v60
    %v143 = vld.sshfl [vmem:[#allocation1] sm:$0xff pattern:$0x75316420]
    %v144 = vld.sshfl [vmem:[#allocation1 + $0x8] sm:$0xff pattern:$0x75316420]
    %v147 = vsel %vm140, %v143, 0.0
    %v148 = vsel %vm141, %v144, 0.0
    %149 = vst [vmem:[#allocation1] ss:$2 sm:$0xff] %v60
    %v150 = vld.sshfl [vmem:[#allocation1] sm:$0xff pattern:$0x75316420]
    %v151 = vld.sshfl [vmem:[#allocation1 + $0x8] sm:$0xff pattern:$0x75316420]
    %154 = vrot.lane.b32.xlu0 %v150, 127
    %v155 = vpop.permute.xlu0 %154
    %156 = vrot.lane.b32.xlu0 %v151, 127
    %v157 = vpop.permute.xlu0 %156
    %vm158 = vcmp.lt.s32.totalorder %v72, 127
    %v159 = vsel %vm158, %v155, %v157
    %v160 = vsel %vm158, %v157, %v155
    %v161 = vperm.slane %v76, 5
    %v162 = vperm.slane %v77, 5
    %vm163 = vcmp.eq.s32.totalorder %v161, 1
    %vm164 = vcmp.eq.s32.totalorder %v162, 1
    %v165 = vsel %vm163, %v159, 0.0
    %v166 = vsel %vm164, %v160, 0.0
    %167 = vst [vmem:[#allocation1] ss:$2 sm:$0xff] %v60
    %v168 = vld.sshfl [vmem:[#allocation1] sm:$0xff pattern:$0x75316420]
    %v169 = vld.sshfl [vmem:[#allocation1 + $0x8] sm:$0xff pattern:$0x75316420]
    %172 = vrot.lane.b32.xlu0 %v168, 113
    %v173 = vpop.permute.xlu0 %172
    %174 = vrot.lane.b32.xlu0 %v169, 113
    %v175 = vpop.permute.xlu0 %174
    %vm176 = vcmp.lt.s32.totalorder %v72, 113
    %v177 = vsel %vm176, %v173, %v175
    %v178 = vsel %vm176, %v175, %v173
    %v179 = vperm.slane %v76, 6
    %v180 = vperm.slane %v77, 6
    %vm181 = vcmp.eq.s32.totalorder %v179, 1
    %vm182 = vcmp.eq.s32.totalorder %v180, 1
    %v183 = vsel %vm181, %v177, 0.0
    %v184 = vsel %vm182, %v178, 0.0
    %185 = vst [vmem:[#allocation1] ss:$2 sm:$0xff] %v60
    %v186 = vld.sshfl [vmem:[#allocation1] sm:$0xff pattern:$0x75316420]
    %v187 = vld.sshfl [vmem:[#allocation1 + $0x8] sm:$0xff pattern:$0x75316420]
    %190 = vrot.lane.b32.xlu0 %v186, 112
    %v191 = vpop.permute.xlu0 %190
    %192 = vrot.lane.b32.xlu0 %v187, 112
    %v193 = vpop.permute.xlu0 %192
    %vm194 = vcmp.lt.s32.totalorder %v72, 112
    %v195 = vsel %vm194, %v191, %v193
    %v196 = vsel %vm194, %v193, %v191
    %v197 = vperm.slane %v76, 7
    %v198 = vperm.slane %v77, 7
    %vm199 = vcmp.eq.s32.totalorder %v197, 1
    %vm200 = vcmp.eq.s32.totalorder %v198, 1
    %v201 = vsel %vm199, %v195, 0.0
    %v202 = vsel %vm200, %v196, 0.0
    %203 = vst [vmem:[#allocation1] ss:$2 sm:$0xff] %v60
    %v204 = vld.sshfl [vmem:[#allocation1] sm:$0xff pattern:$0x75316420]
    %v205 = vld.sshfl [vmem:[#allocation1 + $0x8] sm:$0xff pattern:$0x75316420]
    %208 = vrot.lane.b32.xlu0 %v204, 111
    %v209 = vpop.permute.xlu0 %208
    %210 = vrot.lane.b32.xlu0 %v205, 111
    %v211 = vpop.permute.xlu0 %210
    %vm212 = vcmp.lt.s32.totalorder %v72, 111
    %v213 = vsel %vm212, %v209, %v211
    %v214 = vsel %vm212, %v211, %v209
    %v215 = vsel %vm58, 1, 0
    %v216 = vsel %vm59, 1, 0
    %v217 = vperm.slane %v215, 0
    %v218 = vperm.slane %v216, 0
    %vm219 = vcmp.eq.s32.totalorder %v217, 1
    %vm220 = vcmp.eq.s32.totalorder %v218, 1
    %v221 = vsel %vm219, %v213, 0.0
    %v222 = vsel %vm220, %v214, 0.0
    %v225 = vrot.slane %v100, 4
    %v226 = vrot.slane %v101, 4
    %v231 = vrot.slane %v136, 4
    %v232 = vrot.slane %v137, 4
    %v237 = vrot.slane %v165, 4
    %v238 = vrot.slane %v166, 4
    %v243 = vrot.slane %v201, 4
    %v244 = vrot.slane %v202, 4
    %vm247 = vcmask 1043456
    %v248 = vsel %vm247, %v82, %v225
    %v249 = vsel %vm247, %v83, %v226
    %v250 = vsel %vm247, %v118, %v231
    %v251 = vsel %vm247, %v119, %v232
    %v252 = vsel %vm247, %v147, %v237
    %v253 = vsel %vm247, %v148, %v238
    %v254 = vsel %vm247, %v183, %v243
    %v255 = vsel %vm247, %v184, %v244
    %257 = vset.pattern.permute.xlu0 0
    %258 = vperm.xlu0 %257, %v51
    %v259 = vpop.permute.xlu0 %258
    %vm261 = vcmask 293888
    %v263 = vsel %vm261, %v50, 0
    %v266 = vsel %vm247, %v221, 0
    %v269 = vsel %vm247, %v222, 0
    %271 = vmatpush.msra.mxu0 0.0
    %272 = vmatpush.msra.mxu0 0.0
    %273 = vmatpush.msra.mxu0 0.0
    %274 = vmatpush.msra.mxu0 0.0
    %275 = vmatpush.msra.mxu0 0.0
    %276 = vmatpush.msra.mxu0 0.0
    %277 = vmatpush.msra.mxu0 0.0
    %278 = vmatpush.msra.mxu0 0.0
    %279 = vmatpush.msra.mxu0 0.0
    %280 = vmatpush.msra.mxu0 0.0
    %281 = vmatpush.msra.mxu0 0.0
    %v282 = vand.u32 %v266, 4294901760
    %283 = vmatpush.msra.mxu0 %v282
    %v284 = vand.u32 %v254, 4294901760
    %285 = vmatpush.msra.mxu0 %v284
    %v286 = vand.u32 %v252, 4294901760
    %287 = vmatpush.msra.mxu0 %v286
    %v288 = vand.u32 %v250, 4294901760
    %289 = vmatpush.msra.mxu0 %v288
    %v290 = vand.u32 %v248, 4294901760
    %291 = vmatpush.msra.mxu0 %v290
    %v292 = vand.u32 %v263, 4294901760
    %v293 = vsub.f32 %v263, %v292
    %v294 = vand.u32 %v293, 4294901760
    %v295 = vsub.f32 %v293, %v294
    %v296 = vand.u32 %v295, 4294901760
    %297 = vmatmul.f32.gmra.mxu0 %v296
    %v298 = vpop.f32.mrf.mxu0
    %v299 = vadd.f32 %v259, %v298
    %300 = vdwg.mxu0
    %301 = vmatpush.msra.mxu0 0.0
    %302 = vmatpush.msra.mxu0 0.0
    %303 = vmatpush.msra.mxu0 0.0
    %304 = vmatpush.msra.mxu0 0.0
    %305 = vmatpush.msra.mxu0 0.0
    %306 = vmatpush.msra.mxu0 0.0
    %307 = vmatpush.msra.mxu0 0.0
    %308 = vmatpush.msra.mxu0 0.0
    %309 = vmatpush.msra.mxu0 0.0
    %310 = vmatpush.msra.mxu0 0.0
    %311 = vmatpush.msra.mxu0 0.0
    %v312 = vand.u32 %v266, 4294901760
    %v313 = vsub.f32 %v266, %v312
    %v314 = vand.u32 %v313, 4294901760
    %v315 = vsub.f32 %v313, %v314
    %v316 = vand.u32 %v315, 4294901760
    %317 = vmatpush.msra.mxu0 %v316
    %v318 = vand.u32 %v254, 4294901760
    %v319 = vsub.f32 %v254, %v318
    %v320 = vand.u32 %v319, 4294901760
    %v321 = vsub.f32 %v319, %v320
    %v322 = vand.u32 %v321, 4294901760
    %323 = vmatpush.msra.mxu0 %v322
    %v324 = vand.u32 %v252, 4294901760
    %v325 = vsub.f32 %v252, %v324
    %v326 = vand.u32 %v325, 4294901760
    %v327 = vsub.f32 %v325, %v326
    %v328 = vand.u32 %v327, 4294901760
    %329 = vmatpush.msra.mxu0 %v328
    %v330 = vand.u32 %v250, 4294901760
    %v331 = vsub.f32 %v250, %v330
    %v332 = vand.u32 %v331, 4294901760
    %v333 = vsub.f32 %v331, %v332
    %v334 = vand.u32 %v333, 4294901760
    %335 = vmatpush.msra.mxu0 %v334
    %v336 = vand.u32 %v248, 4294901760
    %v337 = vsub.f32 %v248, %v336
    %v338 = vand.u32 %v337, 4294901760
    %v339 = vsub.f32 %v337, %v338
    %v340 = vand.u32 %v339, 4294901760
    %341 = vmatpush.msra.mxu0 %v340
    %v342 = vand.u32 %v263, 4294901760
    %343 = vmatmul.f32.gmra.mxu0 %v342
    %v344 = vpop.f32.mrf.mxu0
    %v345 = vadd.f32 %v299, %v344
    %346 = vdwg.mxu0
    %347 = vmatpush.msra.mxu0 0.0
    %348 = vmatpush.msra.mxu0 0.0
    %349 = vmatpush.msra.mxu0 0.0
    %350 = vmatpush.msra.mxu0 0.0
    %351 = vmatpush.msra.mxu0 0.0
    %352 = vmatpush.msra.mxu0 0.0
    %353 = vmatpush.msra.mxu0 0.0
    %354 = vmatpush.msra.mxu0 0.0
    %355 = vmatpush.msra.mxu0 0.0
    %356 = vmatpush.msra.mxu0 0.0
    %357 = vmatpush.msra.mxu0 0.0
    %v358 = vand.u32 %v266, 4294901760
    %v359 = vsub.f32 %v266, %v358
    %360 = vmatpush.msra.mxu0 %v359
    %v361 = vand.u32 %v254, 4294901760
    %v362 = vsub.f32 %v254, %v361
    %363 = vmatpush.msra.mxu0 %v362
    %v364 = vand.u32 %v252, 4294901760
    %v365 = vsub.f32 %v252, %v364
    %366 = vmatpush.msra.mxu0 %v365
    %v367 = vand.u32 %v250, 4294901760
    %v368 = vsub.f32 %v250, %v367
    %369 = vmatpush.msra.mxu0 %v368
    %v370 = vand.u32 %v248, 4294901760
    %v371 = vsub.f32 %v248, %v370
    %372 = vmatpush.msra.mxu0 %v371
    %v373 = vand.u32 %v263, 4294901760
    %v374 = vsub.f32 %v263, %v373
    %375 = vmatmul.f32.gmra.mxu0 %v374
    %v376 = vpop.f32.mrf.mxu0
    %v377 = vadd.f32 %v345, %v376
    %378 = vdwg.mxu0
    %379 = vmatpush.msra.mxu0 0.0
    %380 = vmatpush.msra.mxu0 0.0
    %381 = vmatpush.msra.mxu0 0.0
    %382 = vmatpush.msra.mxu0 0.0
    %383 = vmatpush.msra.mxu0 0.0
    %384 = vmatpush.msra.mxu0 0.0
    %385 = vmatpush.msra.mxu0 0.0
    %386 = vmatpush.msra.mxu0 0.0
    %387 = vmatpush.msra.mxu0 0.0
    %388 = vmatpush.msra.mxu0 0.0
    %389 = vmatpush.msra.mxu0 0.0
    %v390 = vand.u32 %v266, 4294901760
    %391 = vmatpush.msra.mxu0 %v390
    %v392 = vand.u32 %v254, 4294901760
    %393 = vmatpush.msra.mxu0 %v392
    %v394 = vand.u32 %v252, 4294901760
    %395 = vmatpush.msra.mxu0 %v394
    %v396 = vand.u32 %v250, 4294901760
    %397 = vmatpush.msra.mxu0 %v396
    %v398 = vand.u32 %v248, 4294901760
    %399 = vmatpush.msra.mxu0 %v398
    %v400 = vand.u32 %v263, 4294901760
    %v401 = vsub.f32 %v263, %v400
    %v402 = vand.u32 %v401, 4294901760
    %403 = vmatmul.f32.gmra.mxu0 %v402
    %v404 = vpop.f32.mrf.mxu0
    %v405 = vadd.f32 %v377, %v404
    %406 = vdwg.mxu0
    %407 = vmatpush.msra.mxu0 0.0
    %408 = vmatpush.msra.mxu0 0.0
    %409 = vmatpush.msra.mxu0 0.0
    %410 = vmatpush.msra.mxu0 0.0
    %411 = vmatpush.msra.mxu0 0.0
    %412 = vmatpush.msra.mxu0 0.0
    %413 = vmatpush.msra.mxu0 0.0
    %414 = vmatpush.msra.mxu0 0.0
    %415 = vmatpush.msra.mxu0 0.0
    %416 = vmatpush.msra.mxu0 0.0
    %417 = vmatpush.msra.mxu0 0.0
    %v418 = vand.u32 %v266, 4294901760
    %v419 = vsub.f32 %v266, %v418
    %v420 = vand.u32 %v419, 4294901760
    %421 = vmatpush.msra.mxu0 %v420
    %v422 = vand.u32 %v254, 4294901760
    %v423 = vsub.f32 %v254, %v422
    %v424 = vand.u32 %v423, 4294901760
    %425 = vmatpush.msra.mxu0 %v424
    %v426 = vand.u32 %v252, 4294901760
    %v427 = vsub.f32 %v252, %v426
    %v428 = vand.u32 %v427, 4294901760
    %429 = vmatpush.msra.mxu0 %v428
    %v430 = vand.u32 %v250, 4294901760
    %v431 = vsub.f32 %v250, %v430
    %v432 = vand.u32 %v431, 4294901760
    %433 = vmatpush.msra.mxu0 %v432
    %v434 = vand.u32 %v248, 4294901760
    %v435 = vsub.f32 %v248, %v434
    %v436 = vand.u32 %v435, 4294901760
    %437 = vmatpush.msra.mxu0 %v436
    %v438 = vand.u32 %v263, 4294901760
    %439 = vmatmul.f32.gmra.mxu0 %v438
    %v440 = vpop.f32.mrf.mxu0
    %v441 = vadd.f32 %v405, %v440
    %442 = vdwg.mxu0
    %443 = vmatpush.msra.mxu0 0.0
    %444 = vmatpush.msra.mxu0 0.0
    %445 = vmatpush.msra.mxu0 0.0
    %446 = vmatpush.msra.mxu0 0.0
    %447 = vmatpush.msra.mxu0 0.0
    %448 = vmatpush.msra.mxu0 0.0
    %449 = vmatpush.msra.mxu0 0.0
    %450 = vmatpush.msra.mxu0 0.0
    %451 = vmatpush.msra.mxu0 0.0
    %452 = vmatpush.msra.mxu0 0.0
    %453 = vmatpush.msra.mxu0 0.0
    %v454 = vand.u32 %v266, 4294901760
    %455 = vmatpush.msra.mxu0 %v454
    %v456 = vand.u32 %v254, 4294901760
    %457 = vmatpush.msra.mxu0 %v456
    %v458 = vand.u32 %v252, 4294901760
    %459 = vmatpush.msra.mxu0 %v458
    %v460 = vand.u32 %v250, 4294901760
    %461 = vmatpush.msra.mxu0 %v460
    %v462 = vand.u32 %v248, 4294901760
    %463 = vmatpush.msra.mxu0 %v462
    %v464 = vand.u32 %v263, 4294901760
    %465 = vmatmul.f32.gmra.mxu0 %v464
    %v466 = vpop.f32.mrf.mxu0
    %v467 = vadd.f32 %v441, %v466
    %468 = vdwg.mxu0
    %469 = vmatpush.msra.mxu0 0.0
    %470 = vmatpush.msra.mxu0 0.0
    %471 = vmatpush.msra.mxu0 0.0
    %472 = vmatpush.msra.mxu0 0.0
    %473 = vmatpush.msra.mxu0 0.0
    %474 = vmatpush.msra.mxu0 0.0
    %475 = vmatpush.msra.mxu0 0.0
    %476 = vmatpush.msra.mxu0 0.0
    %477 = vmatpush.msra.mxu0 0.0
    %478 = vmatpush.msra.mxu0 0.0
    %479 = vmatpush.msra.mxu0 0.0
    %v480 = vand.u32 %v269, 4294901760
    %481 = vmatpush.msra.mxu0 %v480
    %v482 = vand.u32 %v255, 4294901760
    %483 = vmatpush.msra.mxu0 %v482
    %v484 = vand.u32 %v253, 4294901760
    %485 = vmatpush.msra.mxu0 %v484
    %v486 = vand.u32 %v251, 4294901760
    %487 = vmatpush.msra.mxu0 %v486
    %v488 = vand.u32 %v249, 4294901760
    %489 = vmatpush.msra.mxu0 %v488
    %v490 = vand.u32 %v263, 4294901760
    %v491 = vsub.f32 %v263, %v490
    %v492 = vand.u32 %v491, 4294901760
    %v493 = vsub.f32 %v491, %v492
    %v494 = vand.u32 %v493, 4294901760
    %495 = vmatmul.f32.gmra.mxu0 %v494
    %v496 = vpop.f32.mrf.mxu0
    %v497 = vadd.f32 %v259, %v496
    %498 = vdwg.mxu0
    %499 = vmatpush.msra.mxu0 0.0
    %500 = vmatpush.msra.mxu0 0.0
    %501 = vmatpush.msra.mxu0 0.0
    %502 = vmatpush.msra.mxu0 0.0
    %503 = vmatpush.msra.mxu0 0.0
    %504 = vmatpush.msra.mxu0 0.0
    %505 = vmatpush.msra.mxu0 0.0
    %506 = vmatpush.msra.mxu0 0.0
    %507 = vmatpush.msra.mxu0 0.0
    %508 = vmatpush.msra.mxu0 0.0
    %509 = vmatpush.msra.mxu0 0.0
    %v510 = vand.u32 %v269, 4294901760
    %v511 = vsub.f32 %v269, %v510
    %v512 = vand.u32 %v511, 4294901760
    %v513 = vsub.f32 %v511, %v512
    %v514 = vand.u32 %v513, 4294901760
    %515 = vmatpush.msra.mxu0 %v514
    %v516 = vand.u32 %v255, 4294901760
    %v517 = vsub.f32 %v255, %v516
    %v518 = vand.u32 %v517, 4294901760
    %v519 = vsub.f32 %v517, %v518
    %v520 = vand.u32 %v519, 4294901760
    %521 = vmatpush.msra.mxu0 %v520
    %v522 = vand.u32 %v253, 4294901760
    %v523 = vsub.f32 %v253, %v522
    %v524 = vand.u32 %v523, 4294901760
    %v525 = vsub.f32 %v523, %v524
    %v526 = vand.u32 %v525, 4294901760
    %527 = vmatpush.msra.mxu0 %v526
    %v528 = vand.u32 %v251, 4294901760
    %v529 = vsub.f32 %v251, %v528
    %v530 = vand.u32 %v529, 4294901760
    %v531 = vsub.f32 %v529, %v530
    %v532 = vand.u32 %v531, 4294901760
    %533 = vmatpush.msra.mxu0 %v532
    %v534 = vand.u32 %v249, 4294901760
    %v535 = vsub.f32 %v249, %v534
    %v536 = vand.u32 %v535, 4294901760
    %v537 = vsub.f32 %v535, %v536
    %v538 = vand.u32 %v537, 4294901760
    %539 = vmatpush.msra.mxu0 %v538
    %v540 = vand.u32 %v263, 4294901760
    %541 = vmatmul.f32.gmra.mxu0 %v540
    %v542 = vpop.f32.mrf.mxu0
    %v543 = vadd.f32 %v497, %v542
    %544 = vdwg.mxu0
    %545 = vmatpush.msra.mxu0 0.0
    %546 = vmatpush.msra.mxu0 0.0
    %547 = vmatpush.msra.mxu0 0.0
    %548 = vmatpush.msra.mxu0 0.0
    %549 = vmatpush.msra.mxu0 0.0
    %550 = vmatpush.msra.mxu0 0.0
    %551 = vmatpush.msra.mxu0 0.0
    %552 = vmatpush.msra.mxu0 0.0
    %553 = vmatpush.msra.mxu0 0.0
    %554 = vmatpush.msra.mxu0 0.0
    %555 = vmatpush.msra.mxu0 0.0
    %v556 = vand.u32 %v269, 4294901760
    %v557 = vsub.f32 %v269, %v556
    %558 = vmatpush.msra.mxu0 %v557
    %v559 = vand.u32 %v255, 4294901760
    %v560 = vsub.f32 %v255, %v559
    %561 = vmatpush.msra.mxu0 %v560
    %v562 = vand.u32 %v253, 4294901760
    %v563 = vsub.f32 %v253, %v562
    %564 = vmatpush.msra.mxu0 %v563
    %v565 = vand.u32 %v251, 4294901760
    %v566 = vsub.f32 %v251, %v565
    %567 = vmatpush.msra.mxu0 %v566
    %v568 = vand.u32 %v249, 4294901760
    %v569 = vsub.f32 %v249, %v568
    %570 = vmatpush.msra.mxu0 %v569
    %v571 = vand.u32 %v263, 4294901760
    %v572 = vsub.f32 %v263, %v571
    %573 = vmatmul.f32.gmra.mxu0 %v572
    %v574 = vpop.f32.mrf.mxu0
    %v575 = vadd.f32 %v543, %v574
    %576 = vdwg.mxu0
    %577 = vmatpush.msra.mxu0 0.0
    %578 = vmatpush.msra.mxu0 0.0
    %579 = vmatpush.msra.mxu0 0.0
    %580 = vmatpush.msra.mxu0 0.0
    %581 = vmatpush.msra.mxu0 0.0
    %582 = vmatpush.msra.mxu0 0.0
    %583 = vmatpush.msra.mxu0 0.0
    %584 = vmatpush.msra.mxu0 0.0
    %585 = vmatpush.msra.mxu0 0.0
    %586 = vmatpush.msra.mxu0 0.0
    %587 = vmatpush.msra.mxu0 0.0
    %v588 = vand.u32 %v269, 4294901760
    %589 = vmatpush.msra.mxu0 %v588
    %v590 = vand.u32 %v255, 4294901760
    %591 = vmatpush.msra.mxu0 %v590
    %v592 = vand.u32 %v253, 4294901760
    %593 = vmatpush.msra.mxu0 %v592
    %v594 = vand.u32 %v251, 4294901760
    %595 = vmatpush.msra.mxu0 %v594
    %v596 = vand.u32 %v249, 4294901760
    %597 = vmatpush.msra.mxu0 %v596
    %v598 = vand.u32 %v263, 4294901760
    %v599 = vsub.f32 %v263, %v598
    %v600 = vand.u32 %v599, 4294901760
    %601 = vmatmul.f32.gmra.mxu0 %v600
    %v602 = vpop.f32.mrf.mxu0
    %v603 = vadd.f32 %v575, %v602
    %604 = vdwg.mxu0
    %605 = vmatpush.msra.mxu0 0.0
    %606 = vmatpush.msra.mxu0 0.0
    %607 = vmatpush.msra.mxu0 0.0
    %608 = vmatpush.msra.mxu0 0.0
    %609 = vmatpush.msra.mxu0 0.0
    %610 = vmatpush.msra.mxu0 0.0
    %611 = vmatpush.msra.mxu0 0.0
    %612 = vmatpush.msra.mxu0 0.0
    %613 = vmatpush.msra.mxu0 0.0
    %614 = vmatpush.msra.mxu0 0.0
    %615 = vmatpush.msra.mxu0 0.0
    %v616 = vand.u32 %v269, 4294901760
    %v617 = vsub.f32 %v269, %v616
    %v618 = vand.u32 %v617, 4294901760
    %619 = vmatpush.msra.mxu0 %v618
    %v620 = vand.u32 %v255, 4294901760
    %v621 = vsub.f32 %v255, %v620
    %v622 = vand.u32 %v621, 4294901760
    %623 = vmatpush.msra.mxu0 %v622
    %v624 = vand.u32 %v253, 4294901760
    %v625 = vsub.f32 %v253, %v624
    %v626 = vand.u32 %v625, 4294901760
    %627 = vmatpush.msra.mxu0 %v626
    %v628 = vand.u32 %v251, 4294901760
    %v629 = vsub.f32 %v251, %v628
    %v630 = vand.u32 %v629, 4294901760
    %631 = vmatpush.msra.mxu0 %v630
    %v632 = vand.u32 %v249, 4294901760
    %v633 = vsub.f32 %v249, %v632
    %v634 = vand.u32 %v633, 4294901760
    %635 = vmatpush.msra.mxu0 %v634
    %v636 = vand.u32 %v263, 4294901760
    %637 = vmatmul.f32.gmra.mxu0 %v636
    %v638 = vpop.f32.mrf.mxu0
    %v639 = vadd.f32 %v603, %v638
    %640 = vdwg.mxu0
    %641 = vmatpush.msra.mxu0 0.0
    %642 = vmatpush.msra.mxu0 0.0
    %643 = vmatpush.msra.mxu0 0.0
    %644 = vmatpush.msra.mxu0 0.0
    %645 = vmatpush.msra.mxu0 0.0
    %646 = vmatpush.msra.mxu0 0.0
    %647 = vmatpush.msra.mxu0 0.0
    %648 = vmatpush.msra.mxu0 0.0
    %649 = vmatpush.msra.mxu0 0.0
    %650 = vmatpush.msra.mxu0 0.0
    %651 = vmatpush.msra.mxu0 0.0
    %v652 = vand.u32 %v269, 4294901760
    %653 = vmatpush.msra.mxu0 %v652
    %v654 = vand.u32 %v255, 4294901760
    %655 = vmatpush.msra.mxu0 %v654
    %v656 = vand.u32 %v253, 4294901760
    %657 = vmatpush.msra.mxu0 %v656
    %v658 = vand.u32 %v251, 4294901760
    %659 = vmatpush.msra.mxu0 %v658
    %v660 = vand.u32 %v249, 4294901760
    %661 = vmatpush.msra.mxu0 %v660
    %v662 = vand.u32 %v263, 4294901760
    %663 = vmatmul.f32.gmra.mxu0 %v662
    %v664 = vpop.f32.mrf.mxu0
    %v665 = vadd.f32 %v639, %v664
    %666 = vdwg.mxu0
    %v667 = vmax.f32 %v467, 0.0
    %v668 = vmax.f32 %v665, 0.0
    %669 = vst [vmem:[#allocation7] sm:$0xff] %v667
    %670 = vst [vmem:[#allocation7 + $0x8] sm:$0xff] %v668
    %s671 = scalar_lea.vmem [#allocation2], 8
    %v672 = vld [vmem:[%s671] sm:$0xff]
    %674 = vst [vmem:[#allocation1] ss:$2 sm:$0xff] %v672
    %v675 = vld.sshfl [vmem:[#allocation1] sm:$0xff pattern:$0x75316420]
    %v676 = vld.sshfl [vmem:[#allocation1 + $0x8] sm:$0xff pattern:$0x75316420]
    %679 = vrot.lane.b32.xlu0 %v675, 17
    %v680 = vpop.permute.xlu0 %679
    %681 = vrot.lane.b32.xlu0 %v676, 17
    %v682 = vpop.permute.xlu0 %681
    %v683 = vsel %vm73, %v680, %v682
    %v684 = vsel %vm73, %v682, %v680
    %v685 = vsel %vm80, %v684, 0.0
    %v686 = vsel %vm81, %v683, 0.0
    %687 = vst [vmem:[#allocation1] ss:$2 sm:$0xff] %v672
    %v688 = vld.sshfl [vmem:[#allocation1] sm:$0xff pattern:$0x75316420]
    %v689 = vld.sshfl [vmem:[#allocation1 + $0x8] sm:$0xff pattern:$0x75316420]
    %692 = vrot.lane.b32.xlu0 %v688, 16
    %v693 = vpop.permute.xlu0 %692
    %694 = vrot.lane.b32.xlu0 %v689, 16
    %v695 = vpop.permute.xlu0 %694
    %v696 = vsel %vm93, %v693, %v695
    %v697 = vsel %vm93, %v695, %v693
    %v698 = vsel %vm98, %v697, 0.0
    %v699 = vsel %vm99, %v696, 0.0
    %700 = vst [vmem:[#allocation1] ss:$2 sm:$0xff] %v672
    %v701 = vld.sshfl [vmem:[#allocation1] sm:$0xff pattern:$0x75316420]
    %v702 = vld.sshfl [vmem:[#allocation1 + $0x8] sm:$0xff pattern:$0x75316420]
    %705 = vrot.lane.b32.xlu0 %v701, 15
    %v706 = vpop.permute.xlu0 %705
    %707 = vrot.lane.b32.xlu0 %v702, 15
    %v708 = vpop.permute.xlu0 %707
    %v709 = vsel %vm111, %v706, %v708
    %v710 = vsel %vm111, %v708, %v706
    %v711 = vsel %vm116, %v710, 0.0
    %v712 = vsel %vm117, %v709, 0.0
    %713 = vst [vmem:[#allocation1] ss:$2 sm:$0xff] %v672
    %v714 = vld.sshfl [vmem:[#allocation1] sm:$0xff pattern:$0x75316420]
    %v715 = vld.sshfl [vmem:[#allocation1 + $0x8] sm:$0xff pattern:$0x75316420]
    %718 = vrot.lane.b32.xlu0 %v714, 1
    %v719 = vpop.permute.xlu0 %718
    %720 = vrot.lane.b32.xlu0 %v715, 1
    %v721 = vpop.permute.xlu0 %720
    %v722 = vsel %vm129, %v719, %v721
    %v723 = vsel %vm129, %v721, %v719
    %v724 = vsel %vm134, %v723, 0.0
    %v725 = vsel %vm135, %v722, 0.0
    %726 = vst [vmem:[#allocation1] ss:$2 sm:$0xff] %v672
    %v727 = vld.sshfl [vmem:[#allocation1] sm:$0xff pattern:$0x75316420]
    %v728 = vld.sshfl [vmem:[#allocation1 + $0x8] sm:$0xff pattern:$0x75316420]
    %v731 = vsel %vm140, %v727, 0.0
    %v732 = vsel %vm141, %v728, 0.0
    %733 = vst [vmem:[#allocation1] ss:$2 sm:$0xff] %v672
    %v734 = vld.sshfl [vmem:[#allocation1] sm:$0xff pattern:$0x75316420]
    %v735 = vld.sshfl [vmem:[#allocation1 + $0x8] sm:$0xff pattern:$0x75316420]
    %738 = vrot.lane.b32.xlu0 %v734, 127
    %v739 = vpop.permute.xlu0 %738
    %740 = vrot.lane.b32.xlu0 %v735, 127
    %v741 = vpop.permute.xlu0 %740
    %v742 = vsel %vm158, %v739, %v741
    %v743 = vsel %vm158, %v741, %v739
    %v744 = vsel %vm163, %v742, 0.0
    %v745 = vsel %vm164, %v743, 0.0
    %746 = vst [vmem:[#allocation1] ss:$2 sm:$0xff] %v672
    %v747 = vld.sshfl [vmem:[#allocation1] sm:$0xff pattern:$0x75316420]
    %v748 = vld.sshfl [vmem:[#allocation1 + $0x8] sm:$0xff pattern:$0x75316420]
    %751 = vrot.lane.b32.xlu0 %v747, 113
    %v752 = vpop.permute.xlu0 %751
    %753 = vrot.lane.b32.xlu0 %v748, 113
    %v754 = vpop.permute.xlu0 %753
    %v755 = vsel %vm176, %v752, %v754
    %v756 = vsel %vm176, %v754, %v752
    %v757 = vsel %vm181, %v755, 0.0
    %v758 = vsel %vm182, %v756, 0.0
    %759 = vst [vmem:[#allocation1] ss:$2 sm:$0xff] %v672
    %v760 = vld.sshfl [vmem:[#allocation1] sm:$0xff pattern:$0x75316420]
    %v761 = vld.sshfl [vmem:[#allocation1 + $0x8] sm:$0xff pattern:$0x75316420]
    %764 = vrot.lane.b32.xlu0 %v760, 112
    %v765 = vpop.permute.xlu0 %764
    %766 = vrot.lane.b32.xlu0 %v761, 112
    %v767 = vpop.permute.xlu0 %766
    %v768 = vsel %vm194, %v765, %v767
    %v769 = vsel %vm194, %v767, %v765
    %v770 = vsel %vm199, %v768, 0.0
    %v771 = vsel %vm200, %v769, 0.0
    %772 = vst [vmem:[#allocation1] ss:$2 sm:$0xff] %v672
    %v773 = vld.sshfl [vmem:[#allocation1] sm:$0xff pattern:$0x75316420]
    %v774 = vld.sshfl [vmem:[#allocation1 + $0x8] sm:$0xff pattern:$0x75316420]
    %777 = vrot.lane.b32.xlu0 %v773, 111
    %v778 = vpop.permute.xlu0 %777
    %779 = vrot.lane.b32.xlu0 %v774, 111
    %v780 = vpop.permute.xlu0 %779
    %v781 = vsel %vm212, %v778, %v780
    %v782 = vsel %vm212, %v780, %v778
    %v783 = vsel %vm219, %v781, 0.0
    %v784 = vsel %vm220, %v782, 0.0
    %v787 = vrot.slane %v698, 4
    %v788 = vrot.slane %v699, 4
    %v793 = vrot.slane %v724, 4
    %v794 = vrot.slane %v725, 4
    %v799 = vrot.slane %v744, 4
    %v800 = vrot.slane %v745, 4
    %v805 = vrot.slane %v770, 4
    %v806 = vrot.slane %v771, 4
    %v809 = vsel %vm247, %v685, %v787
    %v810 = vsel %vm247, %v686, %v788
    %v811 = vsel %vm247, %v711, %v793
    %v812 = vsel %vm247, %v712, %v794
    %v813 = vsel %vm247, %v731, %v799
    %v814 = vsel %vm247, %v732, %v800
    %v815 = vsel %vm247, %v757, %v805
    %v816 = vsel %vm247, %v758, %v806
    %v818 = vsel %vm247, %v783, 0
    %v821 = vsel %vm247, %v784, 0
    %823 = vmatpush.msra.mxu0 0.0
    %824 = vmatpush.msra.mxu0 0.0
    %825 = vmatpush.msra.mxu0 0.0
    %826 = vmatpush.msra.mxu0 0.0
    %827 = vmatpush.msra.mxu0 0.0
    %828 = vmatpush.msra.mxu0 0.0
    %829 = vmatpush.msra.mxu0 0.0
    %830 = vmatpush.msra.mxu0 0.0
    %831 = vmatpush.msra.mxu0 0.0
    %832 = vmatpush.msra.mxu0 0.0
    %833 = vmatpush.msra.mxu0 0.0
    %v834 = vand.u32 %v818, 4294901760
    %835 = vmatpush.msra.mxu0 %v834
    %v836 = vand.u32 %v815, 4294901760
    %837 = vmatpush.msra.mxu0 %v836
    %v838 = vand.u32 %v813, 4294901760
    %839 = vmatpush.msra.mxu0 %v838
    %v840 = vand.u32 %v811, 4294901760
    %841 = vmatpush.msra.mxu0 %v840
    %v842 = vand.u32 %v809, 4294901760
    %843 = vmatpush.msra.mxu0 %v842
    %v844 = vand.u32 %v263, 4294901760
    %v845 = vsub.f32 %v263, %v844
    %v846 = vand.u32 %v845, 4294901760
    %v847 = vsub.f32 %v845, %v846
    %v848 = vand.u32 %v847, 4294901760
    %849 = vmatmul.f32.gmra.mxu0 %v848
    %v850 = vpop.f32.mrf.mxu0
    %v851 = vadd.f32 %v259, %v850
    %852 = vdwg.mxu0
    %853 = vmatpush.msra.mxu0 0.0
    %854 = vmatpush.msra.mxu0 0.0
    %855 = vmatpush.msra.mxu0 0.0
    %856 = vmatpush.msra.mxu0 0.0
    %857 = vmatpush.msra.mxu0 0.0
    %858 = vmatpush.msra.mxu0 0.0
    %859 = vmatpush.msra.mxu0 0.0
    %860 = vmatpush.msra.mxu0 0.0
    %861 = vmatpush.msra.mxu0 0.0
    %862 = vmatpush.msra.mxu0 0.0
    %863 = vmatpush.msra.mxu0 0.0
    %v864 = vand.u32 %v818, 4294901760
    %v865 = vsub.f32 %v818, %v864
    %v866 = vand.u32 %v865, 4294901760
    %v867 = vsub.f32 %v865, %v866
    %v868 = vand.u32 %v867, 4294901760
    %869 = vmatpush.msra.mxu0 %v868
    %v870 = vand.u32 %v815, 4294901760
    %v871 = vsub.f32 %v815, %v870
    %v872 = vand.u32 %v871, 4294901760
    %v873 = vsub.f32 %v871, %v872
    %v874 = vand.u32 %v873, 4294901760
    %875 = vmatpush.msra.mxu0 %v874
    %v876 = vand.u32 %v813, 4294901760
    %v877 = vsub.f32 %v813, %v876
    %v878 = vand.u32 %v877, 4294901760
    %v879 = vsub.f32 %v877, %v878
    %v880 = vand.u32 %v879, 4294901760
    %881 = vmatpush.msra.mxu0 %v880
    %v882 = vand.u32 %v811, 4294901760
    %v883 = vsub.f32 %v811, %v882
    %v884 = vand.u32 %v883, 4294901760
    %v885 = vsub.f32 %v883, %v884
    %v886 = vand.u32 %v885, 4294901760
    %887 = vmatpush.msra.mxu0 %v886
    %v888 = vand.u32 %v809, 4294901760
    %v889 = vsub.f32 %v809, %v888
    %v890 = vand.u32 %v889, 4294901760
    %v891 = vsub.f32 %v889, %v890
    %v892 = vand.u32 %v891, 4294901760
    %893 = vmatpush.msra.mxu0 %v892
    %v894 = vand.u32 %v263, 4294901760
    %895 = vmatmul.f32.gmra.mxu0 %v894
    %v896 = vpop.f32.mrf.mxu0
    %v897 = vadd.f32 %v851, %v896
    %898 = vdwg.mxu0
    %899 = vmatpush.msra.mxu0 0.0
    %900 = vmatpush.msra.mxu0 0.0
    %901 = vmatpush.msra.mxu0 0.0
    %902 = vmatpush.msra.mxu0 0.0
    %903 = vmatpush.msra.mxu0 0.0
    %904 = vmatpush.msra.mxu0 0.0
    %905 = vmatpush.msra.mxu0 0.0
    %906 = vmatpush.msra.mxu0 0.0
    %907 = vmatpush.msra.mxu0 0.0
    %908 = vmatpush.msra.mxu0 0.0
    %909 = vmatpush.msra.mxu0 0.0
    %v910 = vand.u32 %v818, 4294901760
    %v911 = vsub.f32 %v818, %v910
    %912 = vmatpush.msra.mxu0 %v911
    %v913 = vand.u32 %v815, 4294901760
    %v914 = vsub.f32 %v815, %v913
    %915 = vmatpush.msra.mxu0 %v914
    %v916 = vand.u32 %v813, 4294901760
    %v917 = vsub.f32 %v813, %v916
    %918 = vmatpush.msra.mxu0 %v917
    %v919 = vand.u32 %v811, 4294901760
    %v920 = vsub.f32 %v811, %v919
    %921 = vmatpush.msra.mxu0 %v920
    %v922 = vand.u32 %v809, 4294901760
    %v923 = vsub.f32 %v809, %v922
    %924 = vmatpush.msra.mxu0 %v923
    %v925 = vand.u32 %v263, 4294901760
    %v926 = vsub.f32 %v263, %v925
    %927 = vmatmul.f32.gmra.mxu0 %v926
    %v928 = vpop.f32.mrf.mxu0
    %v929 = vadd.f32 %v897, %v928
    %930 = vdwg.mxu0
    %931 = vmatpush.msra.mxu0 0.0
    %932 = vmatpush.msra.mxu0 0.0
    %933 = vmatpush.msra.mxu0 0.0
    %934 = vmatpush.msra.mxu0 0.0
    %935 = vmatpush.msra.mxu0 0.0
    %936 = vmatpush.msra.mxu0 0.0
    %937 = vmatpush.msra.mxu0 0.0
    %938 = vmatpush.msra.mxu0 0.0
    %939 = vmatpush.msra.mxu0 0.0
    %940 = vmatpush.msra.mxu0 0.0
    %941 = vmatpush.msra.mxu0 0.0
    %v942 = vand.u32 %v818, 4294901760
    %943 = vmatpush.msra.mxu0 %v942
    %v944 = vand.u32 %v815, 4294901760
    %945 = vmatpush.msra.mxu0 %v944
    %v946 = vand.u32 %v813, 4294901760
    %947 = vmatpush.msra.mxu0 %v946
    %v948 = vand.u32 %v811, 4294901760
    %949 = vmatpush.msra.mxu0 %v948
    %v950 = vand.u32 %v809, 4294901760
    %951 = vmatpush.msra.mxu0 %v950
    %v952 = vand.u32 %v263, 4294901760
    %v953 = vsub.f32 %v263, %v952
    %v954 = vand.u32 %v953, 4294901760
    %955 = vmatmul.f32.gmra.mxu0 %v954
    %v956 = vpop.f32.mrf.mxu0
    %v957 = vadd.f32 %v929, %v956
    %958 = vdwg.mxu0
    %959 = vmatpush.msra.mxu0 0.0
    %960 = vmatpush.msra.mxu0 0.0
    %961 = vmatpush.msra.mxu0 0.0
    %962 = vmatpush.msra.mxu0 0.0
    %963 = vmatpush.msra.mxu0 0.0
    %964 = vmatpush.msra.mxu0 0.0
    %965 = vmatpush.msra.mxu0 0.0
    %966 = vmatpush.msra.mxu0 0.0
    %967 = vmatpush.msra.mxu0 0.0
    %968 = vmatpush.msra.mxu0 0.0
    %969 = vmatpush.msra.mxu0 0.0
    %v970 = vand.u32 %v818, 4294901760
    %v971 = vsub.f32 %v818, %v970
    %v972 = vand.u32 %v971, 4294901760
    %973 = vmatpush.msra.mxu0 %v972
    %v974 = vand.u32 %v815, 4294901760
    %v975 = vsub.f32 %v815, %v974
    %v976 = vand.u32 %v975, 4294901760
    %977 = vmatpush.msra.mxu0 %v976
    %v978 = vand.u32 %v813, 4294901760
    %v979 = vsub.f32 %v813, %v978
    %v980 = vand.u32 %v979, 4294901760
    %981 = vmatpush.msra.mxu0 %v980
    %v982 = vand.u32 %v811, 4294901760
    %v983 = vsub.f32 %v811, %v982
    %v984 = vand.u32 %v983, 4294901760
    %985 = vmatpush.msra.mxu0 %v984
    %v986 = vand.u32 %v809, 4294901760
    %v987 = vsub.f32 %v809, %v986
    %v988 = vand.u32 %v987, 4294901760
    %989 = vmatpush.msra.mxu0 %v988
    %v990 = vand.u32 %v263, 4294901760
    %991 = vmatmul.f32.gmra.mxu0 %v990
    %v992 = vpop.f32.mrf.mxu0
    %v993 = vadd.f32 %v957, %v992
    %994 = vdwg.mxu0
    %995 = vmatpush.msra.mxu0 0.0
    %996 = vmatpush.msra.mxu0 0.0
    %997 = vmatpush.msra.mxu0 0.0
    %998 = vmatpush.msra.mxu0 0.0
    %999 = vmatpush.msra.mxu0 0.0
    %1000 = vmatpush.msra.mxu0 0.0
    %1001 = vmatpush.msra.mxu0 0.0
    %1002 = vmatpush.msra.mxu0 0.0
    %1003 = vmatpush.msra.mxu0 0.0
    %1004 = vmatpush.msra.mxu0 0.0
    %1005 = vmatpush.msra.mxu0 0.0
    %v1006 = vand.u32 %v818, 4294901760
    %1007 = vmatpush.msra.mxu0 %v1006
    %v1008 = vand.u32 %v815, 4294901760
    %1009 = vmatpush.msra.mxu0 %v1008
    %v1010 = vand.u32 %v813, 4294901760
    %1011 = vmatpush.msra.mxu0 %v1010
    %v1012 = vand.u32 %v811, 4294901760
    %1013 = vmatpush.msra.mxu0 %v1012
    %v1014 = vand.u32 %v809, 4294901760
    %1015 = vmatpush.msra.mxu0 %v1014
    %v1016 = vand.u32 %v263, 4294901760
    %1017 = vmatmul.f32.gmra.mxu0 %v1016
    %v1018 = vpop.f32.mrf.mxu0
    %v1019 = vadd.f32 %v993, %v1018
    %1020 = vdwg.mxu0
    %1021 = vmatpush.msra.mxu0 0.0
    %1022 = vmatpush.msra.mxu0 0.0
    %1023 = vmatpush.msra.mxu0 0.0
    %1024 = vmatpush.msra.mxu0 0.0
    %1025 = vmatpush.msra.mxu0 0.0
    %1026 = vmatpush.msra.mxu0 0.0
    %1027 = vmatpush.msra.mxu0 0.0
    %1028 = vmatpush.msra.mxu0 0.0
    %1029 = vmatpush.msra.mxu0 0.0
    %1030 = vmatpush.msra.mxu0 0.0
    %1031 = vmatpush.msra.mxu0 0.0
    %v1032 = vand.u32 %v821, 4294901760
    %1033 = vmatpush.msra.mxu0 %v1032
    %v1034 = vand.u32 %v816, 4294901760
    %1035 = vmatpush.msra.mxu0 %v1034
    %v1036 = vand.u32 %v814, 4294901760
    %1037 = vmatpush.msra.mxu0 %v1036
    %v1038 = vand.u32 %v812, 4294901760
    %1039 = vmatpush.msra.mxu0 %v1038
    %v1040 = vand.u32 %v810, 4294901760
    %1041 = vmatpush.msra.mxu0 %v1040
    %v1042 = vand.u32 %v263, 4294901760
    %v1043 = vsub.f32 %v263, %v1042
    %v1044 = vand.u32 %v1043, 4294901760
    %v1045 = vsub.f32 %v1043, %v1044
    %v1046 = vand.u32 %v1045, 4294901760
    %1047 = vmatmul.f32.gmra.mxu0 %v1046
    %v1048 = vpop.f32.mrf.mxu0
    %v1049 = vadd.f32 %v259, %v1048
    %1050 = vdwg.mxu0
    %1051 = vmatpush.msra.mxu0 0.0
    %1052 = vmatpush.msra.mxu0 0.0
    %1053 = vmatpush.msra.mxu0 0.0
    %1054 = vmatpush.msra.mxu0 0.0
    %1055 = vmatpush.msra.mxu0 0.0
    %1056 = vmatpush.msra.mxu0 0.0
    %1057 = vmatpush.msra.mxu0 0.0
    %1058 = vmatpush.msra.mxu0 0.0
    %1059 = vmatpush.msra.mxu0 0.0
    %1060 = vmatpush.msra.mxu0 0.0
    %1061 = vmatpush.msra.mxu0 0.0
    %v1062 = vand.u32 %v821, 4294901760
    %v1063 = vsub.f32 %v821, %v1062
    %v1064 = vand.u32 %v1063, 4294901760
    %v1065 = vsub.f32 %v1063, %v1064
    %v1066 = vand.u32 %v1065, 4294901760
    %1067 = vmatpush.msra.mxu0 %v1066
    %v1068 = vand.u32 %v816, 4294901760
    %v1069 = vsub.f32 %v816, %v1068
    %v1070 = vand.u32 %v1069, 4294901760
    %v1071 = vsub.f32 %v1069, %v1070
    %v1072 = vand.u32 %v1071, 4294901760
    %1073 = vmatpush.msra.mxu0 %v1072
    %v1074 = vand.u32 %v814, 4294901760
    %v1075 = vsub.f32 %v814, %v1074
    %v1076 = vand.u32 %v1075, 4294901760
    %v1077 = vsub.f32 %v1075, %v1076
    %v1078 = vand.u32 %v1077, 4294901760
    %1079 = vmatpush.msra.mxu0 %v1078
    %v1080 = vand.u32 %v812, 4294901760
    %v1081 = vsub.f32 %v812, %v1080
    %v1082 = vand.u32 %v1081, 4294901760
    %v1083 = vsub.f32 %v1081, %v1082
    %v1084 = vand.u32 %v1083, 4294901760
    %1085 = vmatpush.msra.mxu0 %v1084
    %v1086 = vand.u32 %v810, 4294901760
    %v1087 = vsub.f32 %v810, %v1086
    %v1088 = vand.u32 %v1087, 4294901760
    %v1089 = vsub.f32 %v1087, %v1088
    %v1090 = vand.u32 %v1089, 4294901760
    %1091 = vmatpush.msra.mxu0 %v1090
    %v1092 = vand.u32 %v263, 4294901760
    %1093 = vmatmul.f32.gmra.mxu0 %v1092
    %v1094 = vpop.f32.mrf.mxu0
    %v1095 = vadd.f32 %v1049, %v1094
    %1096 = vdwg.mxu0
    %1097 = vmatpush.msra.mxu0 0.0
    %1098 = vmatpush.msra.mxu0 0.0
    %1099 = vmatpush.msra.mxu0 0.0
    %1100 = vmatpush.msra.mxu0 0.0
    %1101 = vmatpush.msra.mxu0 0.0
    %1102 = vmatpush.msra.mxu0 0.0
    %1103 = vmatpush.msra.mxu0 0.0
    %1104 = vmatpush.msra.mxu0 0.0
    %1105 = vmatpush.msra.mxu0 0.0
    %1106 = vmatpush.msra.mxu0 0.0
    %1107 = vmatpush.msra.mxu0 0.0
    %v1108 = vand.u32 %v821, 4294901760
    %v1109 = vsub.f32 %v821, %v1108
    %1110 = vmatpush.msra.mxu0 %v1109
    %v1111 = vand.u32 %v816, 4294901760
    %v1112 = vsub.f32 %v816, %v1111
    %1113 = vmatpush.msra.mxu0 %v1112
    %v1114 = vand.u32 %v814, 4294901760
    %v1115 = vsub.f32 %v814, %v1114
    %1116 = vmatpush.msra.mxu0 %v1115
    %v1117 = vand.u32 %v812, 4294901760
    %v1118 = vsub.f32 %v812, %v1117
    %1119 = vmatpush.msra.mxu0 %v1118
    %v1120 = vand.u32 %v810, 4294901760
    %v1121 = vsub.f32 %v810, %v1120
    %1122 = vmatpush.msra.mxu0 %v1121
    %v1123 = vand.u32 %v263, 4294901760
    %v1124 = vsub.f32 %v263, %v1123
    %1125 = vmatmul.f32.gmra.mxu0 %v1124
    %v1126 = vpop.f32.mrf.mxu0
    %v1127 = vadd.f32 %v1095, %v1126
    %1128 = vdwg.mxu0
    %1129 = vmatpush.msra.mxu0 0.0
    %1130 = vmatpush.msra.mxu0 0.0
    %1131 = vmatpush.msra.mxu0 0.0
    %1132 = vmatpush.msra.mxu0 0.0
    %1133 = vmatpush.msra.mxu0 0.0
    %1134 = vmatpush.msra.mxu0 0.0
    %1135 = vmatpush.msra.mxu0 0.0
    %1136 = vmatpush.msra.mxu0 0.0
    %1137 = vmatpush.msra.mxu0 0.0
    %1138 = vmatpush.msra.mxu0 0.0
    %1139 = vmatpush.msra.mxu0 0.0
    %v1140 = vand.u32 %v821, 4294901760
    %1141 = vmatpush.msra.mxu0 %v1140
    %v1142 = vand.u32 %v816, 4294901760
    %1143 = vmatpush.msra.mxu0 %v1142
    %v1144 = vand.u32 %v814, 4294901760
    %1145 = vmatpush.msra.mxu0 %v1144
    %v1146 = vand.u32 %v812, 4294901760
    %1147 = vmatpush.msra.mxu0 %v1146
    %v1148 = vand.u32 %v810, 4294901760
    %1149 = vmatpush.msra.mxu0 %v1148
    %v1150 = vand.u32 %v263, 4294901760
    %v1151 = vsub.f32 %v263, %v1150
    %v1152 = vand.u32 %v1151, 4294901760
    %1153 = vmatmul.f32.gmra.mxu0 %v1152
    %v1154 = vpop.f32.mrf.mxu0
    %v1155 = vadd.f32 %v1127, %v1154
    %1156 = vdwg.mxu0
    %1157 = vmatpush.msra.mxu0 0.0
    %1158 = vmatpush.msra.mxu0 0.0
    %1159 = vmatpush.msra.mxu0 0.0
    %1160 = vmatpush.msra.mxu0 0.0
    %1161 = vmatpush.msra.mxu0 0.0
    %1162 = vmatpush.msra.mxu0 0.0
    %1163 = vmatpush.msra.mxu0 0.0
    %1164 = vmatpush.msra.mxu0 0.0
    %1165 = vmatpush.msra.mxu0 0.0
    %1166 = vmatpush.msra.mxu0 0.0
    %1167 = vmatpush.msra.mxu0 0.0
    %v1168 = vand.u32 %v821, 4294901760
    %v1169 = vsub.f32 %v821, %v1168
    %v1170 = vand.u32 %v1169, 4294901760
    %1171 = vmatpush.msra.mxu0 %v1170
    %v1172 = vand.u32 %v816, 4294901760
    %v1173 = vsub.f32 %v816, %v1172
    %v1174 = vand.u32 %v1173, 4294901760
    %1175 = vmatpush.msra.mxu0 %v1174
    %v1176 = vand.u32 %v814, 4294901760
    %v1177 = vsub.f32 %v814, %v1176
    %v1178 = vand.u32 %v1177, 4294901760
    %1179 = vmatpush.msra.mxu0 %v1178
    %v1180 = vand.u32 %v812, 4294901760
    %v1181 = vsub.f32 %v812, %v1180
    %v1182 = vand.u32 %v1181, 4294901760
    %1183 = vmatpush.msra.mxu0 %v1182
    %v1184 = vand.u32 %v810, 4294901760
    %v1185 = vsub.f32 %v810, %v1184
    %v1186 = vand.u32 %v1185, 4294901760
    %1187 = vmatpush.msra.mxu0 %v1186
    %v1188 = vand.u32 %v263, 4294901760
    %1189 = vmatmul.f32.gmra.mxu0 %v1188
    %v1190 = vpop.f32.mrf.mxu0
    %v1191 = vadd.f32 %v1155, %v1190
    %1192 = vdwg.mxu0
    %1193 = vmatpush.msra.mxu0 0.0
    %1194 = vmatpush.msra.mxu0 0.0
    %1195 = vmatpush.msra.mxu0 0.0
    %1196 = vmatpush.msra.mxu0 0.0
    %1197 = vmatpush.msra.mxu0 0.0
    %1198 = vmatpush.msra.mxu0 0.0
    %1199 = vmatpush.msra.mxu0 0.0
    %1200 = vmatpush.msra.mxu0 0.0
    %1201 = vmatpush.msra.mxu0 0.0
    %1202 = vmatpush.msra.mxu0 0.0
    %1203 = vmatpush.msra.mxu0 0.0
    %v1204 = vand.u32 %v821, 4294901760
    %1205 = vmatpush.msra.mxu0 %v1204
    %v1206 = vand.u32 %v816, 4294901760
    %1207 = vmatpush.msra.mxu0 %v1206
    %v1208 = vand.u32 %v814, 4294901760
    %1209 = vmatpush.msra.mxu0 %v1208
    %v1210 = vand.u32 %v812, 4294901760
    %1211 = vmatpush.msra.mxu0 %v1210
    %v1212 = vand.u32 %v810, 4294901760
    %1213 = vmatpush.msra.mxu0 %v1212
    %v1214 = vand.u32 %v263, 4294901760
    %1215 = vmatmul.f32.gmra.mxu0 %v1214
    %v1216 = vpop.f32.mrf.mxu0
    %v1217 = vadd.f32 %v1191, %v1216
    %1218 = vdwg.mxu0
    %v1219 = vmax.f32 %v1019, 0.0
    %v1220 = vmax.f32 %v1217, 0.0
    %s1221 = scalar_lea.vmem [#allocation7], 16
    %1222 = vst [vmem:[%s1221] sm:$0xff] %v1219
    %1223 = vst [vmem:[%s1221 + $0x8] sm:$0xff] %v1220
    // Predicated region
    $region26: #{tpu_custom_call.1} parent=1 // pred_check
      _
    $region27: #{tpu_custom_call.1} parent=1 // pred_check_branch
      %1225 = sbr.rel (0) target = $region29
    $region28: #{tpu_custom_call.1} parent=1 // pred_region
      %1227 = vsyncadd [#allocation4], 0
      %s1228 = sshll.u32 [#allocation7], 4
      %s1229 = int_to_ptr.vmem [resolvable:$true] %s1228
      %s1230 = sshll.u32 %s4, 4
      %s1231 = int_to_ptr.hbm [resolvable:$true] %s1230
      %1236 = dma.vmem_to_hbm [thread:$0]  %s1229, 512, %s1231, [#allocation4], 256, 256, 16
    $region29: #{tpu_custom_call.1} parent=1 // pred_fallthru
      _
    // Predicated region
    $region30: #{tpu_custom_call.1} parent=1 // pred_check
      _
    $region31: #{tpu_custom_call.1} parent=1 // pred_check_branch
      %1238 = sbr.rel (0) target = $region33
    $region32: #{tpu_custom_call.1} parent=1 // pred_region
      %1240 = dma.done [#allocation4], 512
    $region33: #{tpu_custom_call.1} parent=1 // pred_fallthru
      _
    %1241 = vsyncpa [#allocation3], 1
    %1242 = vsyncpa [#allocation6], 1
    %1243 = vsyncpa [#allocation4], 1

</llo_original>
